<compile_context>
chip_gen: v6e
topology: v6e:2x2x1
jax: 0.10.0
libtpu: 0.0.40
codegen_flags: <defaults>
</compile_context>

<pallas_src>
import numpy as np
import jax
import jax.numpy as jnp
from jax.experimental import pallas as pl
from jax.experimental.pallas import tpu as pltpu

BN_EPS = 1e-5


# ---------------------------------------------------------------------------
# Bilinear transposed-conv operator (== utils.bilinear_upsample_weights +
# F.conv_transpose2d(stride=factor, padding=factor//2)) as a dense matrix.
# ---------------------------------------------------------------------------
def _bilinear_1d_kernel(factor):
    size = 2 * factor - factor % 2
    center = factor - 1.0 if size % 2 == 1 else factor - 0.5
    return 1.0 - np.abs(np.arange(size, dtype=np.float64) - center) / factor


def _upsample_matrix_1d(factor, in_size, out_size):
    k1d = _bilinear_1d_kernel(factor)
    pad = factor // 2
    u = np.zeros((out_size, in_size), dtype=np.float64)
    for i in range(in_size):
        for kk in range(k1d.shape[0]):
            y = i * factor - pad + kk
            if 0 <= y < out_size:
                u[y, i] += k1d[kk]
    return u


def _upsample_matrix_2d(factor, in_hw, out_hw):
    uh = _upsample_matrix_1d(factor, in_hw[0], out_hw[0])
    uw = _upsample_matrix_1d(factor, in_hw[1], out_hw[1])
    return np.kron(uh, uw).astype(np.float32)          # (H*W, H2*W2)


# ---------------------------------------------------------------------------
# Wrapper-side layout plumbing (XLA glue): im2col + parameter folding.
# ---------------------------------------------------------------------------
def _im2col_3x3(x):
    """(B, C, H, W) -> (B, 9*C + 1, H*W); last row is ones (bias term)."""
    b, c, h, w = x.shape
    xp = jnp.pad(x, ((0, 0), (0, 0), (1, 1), (1, 1)))
    taps = [xp[:, :, dy:dy + h, dx:dx + w] for dy in range(3) for dx in range(3)]
    patches = jnp.concatenate(taps, axis=1).reshape(b, 9 * c, h * w)
    ones = jnp.ones((b, 1, h * w), dtype=x.dtype)
    return jnp.concatenate([patches, ones], axis=1)


def _fold_conv_bn_scale(conv_w, conv_b, gamma, beta, mean, var, adap_w):
    """Fold conv bias + eval-mode BN affine + sigmoid(adap_w) into a single
    (Cout, 9*Cin + 1) matmul matrix matching _im2col_3x3's row order."""
    cout = conv_w.shape[0]
    s = jax.nn.sigmoid(adap_w)
    bn_scale = gamma / jnp.sqrt(var + BN_EPS)
    # im2col rows are ordered (tap, cin) -> reorder weight to (cout, ky, kx, cin)
    w = jnp.transpose(conv_w, (0, 2, 3, 1)).reshape(cout, -1)
    w = w * (bn_scale * s)[:, None]
    bias = ((conv_b - mean) * bn_scale + beta) * s
    return jnp.concatenate([w, bias[:, None]], axis=1).astype(jnp.float32)


# ---------------------------------------------------------------------------
# The fused Pallas kernel: conv1 + conv2 (as matmuls) + ReLU + upsample + add.
# ---------------------------------------------------------------------------
def _refine_kernel(p1_ref, p2_ref, w1_ref, w2_ref, up_ref, out_ref):
    w1 = w1_ref[...]                    # (Cout, 9*C0 + 1)
    w2 = w2_ref[...]                    # (Cout, 9*C1 + 1)
    up = up_ref[...]                    # (H2*W2, H*W)
    for b in range(out_ref.shape[0]):   # static unroll over (tiny) batch
        a1 = jnp.maximum(
            jnp.dot(w1, p1_ref[b], preferred_element_type=jnp.float32), 0.0)
        a2 = jnp.maximum(
            jnp.dot(w2, p2_ref[b], preferred_element_type=jnp.float32), 0.0)
        x2u = jnp.dot(a2, up, preferred_element_type=jnp.float32)
        out_ref[b] = (a1 + x2u).astype(out_ref.dtype)


def _refine_pallas(p1, p2, w1, w2, upmat):
    B, K1, N1 = p1.shape
    _, K2, N2 = p2.shape
    cout = w1.shape[0]
    return pl.pallas_call(
        _refine_kernel,
        out_shape=jax.ShapeDtypeStruct((B, cout, N1), jnp.float32),
        grid_spec=pltpu.PrefetchScalarGridSpec(
            num_scalar_prefetch=0,
            grid=(1,),                                     # single step: whole batch
            in_specs=[
                pl.BlockSpec((B, K1, N1), lambda i: (0, 0, 0)),
                pl.BlockSpec((B, K2, N2), lambda i: (0, 0, 0)),
                pl.BlockSpec((cout, K1), lambda i: (0, 0)),
                pl.BlockSpec((cout, K2), lambda i: (0, 0)),
                pl.BlockSpec((N2, N1), lambda i: (0, 0)),
            ],
            out_specs=pl.BlockSpec((B, cout, N1), lambda i: (0, 0, 0)),
        ),
        compiler_params=pltpu.CompilerParams(
            dimension_semantics=("arbitrary",)),
    )(p1, p2, w1, w2, upmat)


# ---------------------------------------------------------------------------
# Module wrapper (parity with Refine_block2_1).
# ---------------------------------------------------------------------------
class RefineBlock21Pallas:
    """JAX/Pallas port of Refine_block2_1 (inference / eval-mode BatchNorm)."""

    def __init__(self, in_channel, out_channel, factor, key):
        c0, c1 = in_channel
        self.out_channel = out_channel
        self.factor = factor
        k = jax.random.split(key, 4)

        def conv_init(kk, cin):
            bound = 1.0 / np.sqrt(9 * cin)
            return jax.random.uniform(kk, (out_channel, cin, 3, 3), jnp.float32,
                                      minval=-bound, maxval=bound)

        self.conv1_w = conv_init(k[0], c0)
        self.conv1_b = jax.random.uniform(k[1], (out_channel,), jnp.float32,
                                          minval=-0.1, maxval=0.1)
        self.conv2_w = conv_init(k[2], c1)
        self.conv2_b = jax.random.uniform(k[3], (out_channel,), jnp.float32,
                                          minval=-0.1, maxval=0.1)

        # BatchNorm2d parameters / running stats at PyTorch init values.
        # TODO(synk): training-mode BN (batch statistics) not implemented; BN is
        # folded as eval-mode affine (standard inference semantics).
        ones = jnp.ones((out_channel,), jnp.float32)
        zeros = jnp.zeros((out_channel,), jnp.float32)
        self.bn1_gamma, self.bn1_beta, self.bn1_mean, self.bn1_var = ones, zeros, zeros, ones
        self.bn2_gamma, self.bn2_beta, self.bn2_mean, self.bn2_var = ones, zeros, zeros, ones

        # adap_conv weights (PyTorch init 0.0 -> sigmoid = 0.5).
        self.adap_w1 = jnp.float32(0.0)
        self.adap_w2 = jnp.float32(0.0)

        # Folded matmul matrices used by the kernel.
        self.w1 = _fold_conv_bn_scale(self.conv1_w, self.conv1_b, self.bn1_gamma,
                                      self.bn1_beta, self.bn1_mean, self.bn1_var,
                                      self.adap_w1)
        self.w2 = _fold_conv_bn_scale(self.conv2_w, self.conv2_b, self.bn2_gamma,
                                      self.bn2_beta, self.bn2_mean, self.bn2_var,
                                      self.adap_w2)

    def __call__(self, x1_in, x2_in):
        b, _, h, w = x1_in.shape
        _, _, h2, w2 = x2_in.shape
        p1 = _im2col_3x3(x1_in.astype(jnp.float32))
        p2 = _im2col_3x3(x2_in.astype(jnp.float32))
        m = _upsample_matrix_2d(self.factor, (h2, w2), (h, w))   # (H*W, H2*W2)
        upmat = jnp.asarray(m.T)                                 # (H2*W2, H*W)
        out = _refine_pallas(p1, p2, self.w1, self.w2, upmat)
        return out.reshape(b, self.out_channel, h, w)


# ---------------------------------------------------------------------------
# Pure-JAX reference for validation.
# ---------------------------------------------------------------------------
def _reference_forward(mod, x1_in, x2_in):
    def branch(x, cw, cb, gamma, beta, mean, var, aw):
        y = jax.lax.conv_general_dilated(
            x, cw, window_strides=(1, 1), padding=((1, 1), (1, 1)),
            dimension_numbers=('NCHW', 'OIHW', 'NCHW'))
        y = y + cb[None, :, None, None]
        y = (y - mean[None, :, None, None]) / jnp.sqrt(var + BN_EPS)[None, :, None, None]
        y = y * gamma[None, :, None, None] + beta[None, :, None, None]
        return jnp.maximum(y, 0.0) * jax.nn.sigmoid(aw)

    x1 = branch(x1_in, mod.conv1_w, mod.conv1_b, mod.bn1_gamma, mod.bn1_beta,
                mod.bn1_mean, mod.bn1_var, mod.adap_w1)
    x2 = branch(x2_in, mod.conv2_w, mod.conv2_b, mod.bn2_gamma, mod.bn2_beta,
                mod.bn2_mean, mod.bn2_var, mod.adap_w2)
    b, c, h2, w2 = x2.shape
    _, _, h, w = x1.shape
    m = jnp.asarray(_upsample_matrix_2d(mod.factor, (h2, w2), (h, w)))
    x2_up = jnp.einsum('bcm,nm->bcn', x2.reshape(b, c, h2 * w2), m)
    return x1 + x2_up.reshape(b, c, h, w)


if __name__ == "__main__":
    key = jax.random.PRNGKey(0)
    k_par, k_x1, k_x2 = jax.random.split(key, 3)

    in_channel = (8, 16)
    out_channel = 8
    factor = 2
    B, H, W = 2, 16, 16
    H2, W2 = H // factor, W // factor

    module = RefineBlock21Pallas(in_channel, out_channel, factor, k_par)

    x1_in = jax.random.uniform(k_x1, (B, in_channel[0], H, W), jnp.float32,
                               minval=-1.0, maxval=1.0)
    x2_in = jax.random.uniform(k_x2, (B, in_channel[1], H2, W2), jnp.float32,
                               minval=-1.0, maxval=1.0)

    out = jax.block_until_ready(module(x1_in, x2_in))

    assert out.shape == (B, out_channel, H, W)
    assert bool(jnp.all(jnp.isfinite(out)))

    ref = jax.block_until_ready(_reference_forward(module, x1_in, x2_in))
    max_err = float(jnp.max(jnp.abs(out - ref)))
    assert max_err < 5e-2, f"mismatch vs reference: {max_err}"

    print("KERNEL_OK")
</pallas_src>

<mosaic_0001>
module attributes {stable_mosaic.version = 11 : i64} {
  func.func @_refine_kernel(%arg0: i32, %arg1: memref<2x73x256xf32, #tpu.memory_space<vmem>>, %arg2: memref<2x145x64xf32, #tpu.memory_space<vmem>>, %arg3: memref<8x73xf32, #tpu.memory_space<vmem>>, %arg4: memref<8x145xf32, #tpu.memory_space<vmem>>, %arg5: memref<64x256xf32, #tpu.memory_space<vmem>>, %arg6: memref<2x8x256xf32, #tpu.memory_space<vmem>>) attributes {dimension_semantics = [#tpu.dimension_semantics<arbitrary>], iteration_bounds = array<i64: 1>, scalar_prefetch = 0 : i64, scratch_operands = 0 : i64, tpu.core_type = #tpu.core_type<tc>, window_params = [{pipeline_mode = #tpu.pipeline_mode<synchronous>, transform_indices = @transform_0, window_bounds = array<i64: 2, 73, 256>}, {pipeline_mode = #tpu.pipeline_mode<synchronous>, transform_indices = @transform_1, window_bounds = array<i64: 2, 145, 64>}, {pipeline_mode = #tpu.pipeline_mode<synchronous>, transform_indices = @transform_2, window_bounds = array<i64: 8, 73>}, {pipeline_mode = #tpu.pipeline_mode<synchronous>, transform_indices = @transform_3, window_bounds = array<i64: 8, 145>}, {pipeline_mode = #tpu.pipeline_mode<synchronous>, transform_indices = @transform_4, window_bounds = array<i64: 64, 256>}, {pipeline_mode = #tpu.pipeline_mode<synchronous>, transform_indices = @transform_5, window_bounds = array<i64: 2, 8, 256>}]} {
    %c0 = arith.constant 0 : index
    %c0_0 = arith.constant 0 : index
    %0 = vector.load %arg3[%c0, %c0_0] : memref<8x73xf32, #tpu.memory_space<vmem>>, vector<8x73xf32>
    %c0_1 = arith.constant 0 : index
    %c0_2 = arith.constant 0 : index
    %1 = vector.load %arg4[%c0_1, %c0_2] : memref<8x145xf32, #tpu.memory_space<vmem>>, vector<8x145xf32>
    %c0_3 = arith.constant 0 : index
    %c0_4 = arith.constant 0 : index
    %2 = vector.load %arg5[%c0_3, %c0_4] : memref<64x256xf32, #tpu.memory_space<vmem>>, vector<64x256xf32>
    %c0_5 = arith.constant 0 : index
    %c0_6 = arith.constant 0 : index
    %c0_7 = arith.constant 0 : index
    %3 = vector.load %arg1[%c0_5, %c0_6, %c0_7] : memref<2x73x256xf32, #tpu.memory_space<vmem>>, vector<1x73x256xf32>
    %4 = vector.shape_cast %3 : vector<1x73x256xf32> to vector<73x256xf32>
    %cst = arith.constant dense<0.000000e+00> : vector<8x256xf32>
    %5 = tpu.matmul %0, %4, %cst {dimension_numbers = #tpu.dot_dimension_numbers<[1], [0], [0], [1], [0, 0, 1, 1], [], []>} : vector<8x73xf32>, vector<73x256xf32>, vector<8x256xf32> -> vector<8x256xf32>
    %cst_8 = arith.constant 0.000000e+00 : f32
    %6 = vector.broadcast %cst_8 : f32 to vector<8x256xf32>
    %7 = arith.maximumf %5, %6 : vector<8x256xf32>
    %c0_9 = arith.constant 0 : index
    %c0_10 = arith.constant 0 : index
    %c0_11 = arith.constant 0 : index
    %8 = vector.load %arg2[%c0_9, %c0_10, %c0_11] : memref<2x145x64xf32, #tpu.memory_space<vmem>>, vector<1x145x64xf32>
    %9 = vector.shape_cast %8 : vector<1x145x64xf32> to vector<145x64xf32>
    %cst_12 = arith.constant dense<0.000000e+00> : vector<8x64xf32>
    %10 = tpu.matmul %1, %9, %cst_12 {dimension_numbers = #tpu.dot_dimension_numbers<[1], [0], [0], [1], [0, 0, 1, 1], [], []>} : vector<8x145xf32>, vector<145x64xf32>, vector<8x64xf32> -> vector<8x64xf32>
    %cst_13 = arith.constant 0.000000e+00 : f32
    %11 = vector.broadcast %cst_13 : f32 to vector<8x64xf32>
    %12 = arith.maximumf %10, %11 : vector<8x64xf32>
    %cst_14 = arith.constant dense<0.000000e+00> : vector<8x256xf32>
    %13 = tpu.matmul %12, %2, %cst_14 {dimension_numbers = #tpu.dot_dimension_numbers<[1], [0], [0], [1], [0, 0, 1, 1], [], []>} : vector<8x64xf32>, vector<64x256xf32>, vector<8x256xf32> -> vector<8x256xf32>
    %14 = arith.addf %7, %13 : vector<8x256xf32>
    %c0_15 = arith.constant 0 : index
    %c0_16 = arith.constant 0 : index
    %c0_17 = arith.constant 0 : index
    %15 = vector.load %arg6[%c0_15, %c0_16, %c0_17] : memref<2x8x256xf32, #tpu.memory_space<vmem>>, vector<1x8x256xf32>
    %16 = vector.shape_cast %15 : vector<1x8x256xf32> to vector<8x256xf32>
    %17 = vector.shape_cast %14 : vector<8x256xf32> to vector<1x8x256xf32>
    tpu.vector_store %arg6[%c0_15, %c0_16, %c0_17], %17 {strides = array<i32>} : memref<2x8x256xf32, #tpu.memory_space<vmem>>, vector<1x8x256xf32>,
    %c1 = arith.constant 1 : index
    %c0_18 = arith.constant 0 : index
    %c0_19 = arith.constant 0 : index
    %18 = vector.load %arg1[%c1, %c0_18, %c0_19] : memref<2x73x256xf32, #tpu.memory_space<vmem>>, vector<1x73x256xf32>
    %19 = vector.shape_cast %18 : vector<1x73x256xf32> to vector<73x256xf32>
    %cst_20 = arith.constant dense<0.000000e+00> : vector<8x256xf32>
    %20 = tpu.matmul %0, %19, %cst_20 {dimension_numbers = #tpu.dot_dimension_numbers<[1], [0], [0], [1], [0, 0, 1, 1], [], []>} : vector<8x73xf32>, vector<73x256xf32>, vector<8x256xf32> -> vector<8x256xf32>
    %cst_21 = arith.constant 0.000000e+00 : f32
    %21 = vector.broadcast %cst_21 : f32 to vector<8x256xf32>
    %22 = arith.maximumf %20, %21 : vector<8x256xf32>
    %c1_22 = arith.constant 1 : index
    %c0_23 = arith.constant 0 : index
    %c0_24 = arith.constant 0 : index
    %23 = vector.load %arg2[%c1_22, %c0_23, %c0_24] : memref<2x145x64xf32, #tpu.memory_space<vmem>>, vector<1x145x64xf32>
    %24 = vector.shape_cast %23 : vector<1x145x64xf32> to vector<145x64xf32>
    %cst_25 = arith.constant dense<0.000000e+00> : vector<8x64xf32>
    %25 = tpu.matmul %1, %24, %cst_25 {dimension_numbers = #tpu.dot_dimension_numbers<[1], [0], [0], [1], [0, 0, 1, 1], [], []>} : vector<8x145xf32>, vector<145x64xf32>, vector<8x64xf32> -> vector<8x64xf32>
    %cst_26 = arith.constant 0.000000e+00 : f32
    %26 = vector.broadcast %cst_26 : f32 to vector<8x64xf32>
    %27 = arith.maximumf %25, %26 : vector<8x64xf32>
    %cst_27 = arith.constant dense<0.000000e+00> : vector<8x256xf32>
    %28 = tpu.matmul %27, %2, %cst_27 {dimension_numbers = #tpu.dot_dimension_numbers<[1], [0], [0], [1], [0, 0, 1, 1], [], []>} : vector<8x64xf32>, vector<64x256xf32>, vector<8x256xf32> -> vector<8x256xf32>
    %29 = arith.addf %22, %28 : vector<8x256xf32>
    %c1_28 = arith.constant 1 : index
    %c0_29 = arith.constant 0 : index
    %c0_30 = arith.constant 0 : index
    %30 = vector.load %arg6[%c1_28, %c0_29, %c0_30] : memref<2x8x256xf32, #tpu.memory_space<vmem>>, vector<1x8x256xf32>
    %31 = vector.shape_cast %30 : vector<1x8x256xf32> to vector<8x256xf32>
    %32 = vector.shape_cast %29 : vector<8x256xf32> to vector<1x8x256xf32>
    tpu.vector_store %arg6[%c1_28, %c0_29, %c0_30], %32 {strides = array<i32>} : memref<2x8x256xf32, #tpu.memory_space<vmem>>, vector<1x8x256xf32>,
    return
  }
  func.func @transform_0(%arg0: i32) -> (i32, i32, i32) {
    %c0_i32 = arith.constant 0 : i32
    %c0_i32_0 = arith.constant 0 : i32
    %c0_i32_1 = arith.constant 0 : i32
    %c0_i32_2 = arith.constant 0 : i32
    return %c0_i32, %c0_i32_0, %c0_i32_1 : i32, i32, i32
  }
  func.func @transform_1(%arg0: i32) -> (i32, i32, i32) {
    %c0_i32 = arith.constant 0 : i32
    %c0_i32_0 = arith.constant 0 : i32
    %c0_i32_1 = arith.constant 0 : i32
    %c0_i32_2 = arith.constant 0 : i32
    return %c0_i32, %c0_i32_0, %c0_i32_1 : i32, i32, i32
  }
  func.func @transform_2(%arg0: i32) -> (i32, i32) {
    %c0_i32 = arith.constant 0 : i32
    %c0_i32_0 = arith.constant 0 : i32
    %c0_i32_1 = arith.constant 0 : i32
    return %c0_i32, %c0_i32_0 : i32, i32
  }
  func.func @transform_3(%arg0: i32) -> (i32, i32) {
    %c0_i32 = arith.constant 0 : i32
    %c0_i32_0 = arith.constant 0 : i32
    %c0_i32_1 = arith.constant 0 : i32
    return %c0_i32, %c0_i32_0 : i32, i32
  }
  func.func @transform_4(%arg0: i32) -> (i32, i32) {
    %c0_i32 = arith.constant 0 : i32
    %c0_i32_0 = arith.constant 0 : i32
    %c0_i32_1 = arith.constant 0 : i32
    return %c0_i32, %c0_i32_0 : i32, i32
  }
  func.func @transform_5(%arg0: i32) -> (i32, i32, i32) {
    %c0_i32 = arith.constant 0 : i32
    %c0_i32_0 = arith.constant 0 : i32
    %c0_i32_1 = arith.constant 0 : i32
    %c0_i32_2 = arith.constant 0 : i32
    return %c0_i32, %c0_i32_0, %c0_i32_1 : i32, i32, i32
  }
}

</mosaic_0001>

<llo_original>
// kernel: tpu_custom_call.1
$region0: #{tpu_custom_call.1}
  #allocation0 [shape = 'u32[]', space=smem, size = 0x4, offset = 0x4, fixed_abs, tag = 'smem constant byte address 0x4 - core index']
  #allocation1 [shape = 'u32[144,128]{1,0:T(1,128)}', space=vmem, size = 0x12000, scoped, tag = 'internal scratch']
  %s0 = inlined_call_operand.vmem [shape: f32[2,73,256], index: 0, kind: input, shape index: {}]
  %s1 = inlined_call_operand.vmem [shape: f32[2,145,64], index: 1, kind: input, shape index: {}]
  %s2 = inlined_call_operand.vmem [shape: f32[8,73], index: 2, kind: input, shape index: {}]
  %s3 = inlined_call_operand.vmem [shape: f32[8,145], index: 3, kind: input, shape index: {}]
  %s4 = inlined_call_operand.vmem [shape: f32[64,256], index: 4, kind: input, shape index: {}]
  %s5 = inlined_call_operand.hbm [shape: f32[2,8,256], index: 5, kind: output, shape index: {}]
  %s6 = sld [smem:[#allocation0]]
  $region30: #{tpu_custom_call.1} parent=0
    _
  %s8 = ssub.s32 1, %s6
  %s9 = scalar_select 0, %s8, %s6
  $region1: #{tpu_custom_call.1} parent=0
    #allocation2 [shape = 'u8[16384]{0}', space=vmem, size = 0x4000, scoped, tag = 'output window, operand 0, single buffered']
    #allocation3 [shape = 's32[1]{0}', space=sflag, size = 0x4, scoped, tag = 'scoped memory for tpu_custom_call.1']
    %10 = vsyncpa [#allocation3], 0
    // Predicated region
    $region2: #{tpu_custom_call.1} parent=1 // pred_check
      _
    $region3: #{tpu_custom_call.1} parent=1 // pred_check_branch
      %12 = sbr.rel (0) target = $region5
    $region4: #{tpu_custom_call.1} parent=1 // pred_region
      _
    $region5: #{tpu_custom_call.1} parent=1 // pred_fallthru
      _
    // Predicated region
    $region6: #{tpu_custom_call.1} parent=1 // pred_check
      _
    $region7: #{tpu_custom_call.1} parent=1 // pred_check_branch
      %14 = sbr.rel (0) target = $region9
    $region8: #{tpu_custom_call.1} parent=1 // pred_region
      _
    $region9: #{tpu_custom_call.1} parent=1 // pred_fallthru
      _
    // Predicated region
    $region10: #{tpu_custom_call.1} parent=1 // pred_check
      _
    $region11: #{tpu_custom_call.1} parent=1 // pred_check_branch
      %16 = sbr.rel (0) target = $region13
    $region12: #{tpu_custom_call.1} parent=1 // pred_region
      _
    $region13: #{tpu_custom_call.1} parent=1 // pred_fallthru
      _
    // Predicated region
    $region14: #{tpu_custom_call.1} parent=1 // pred_check
      _
    $region15: #{tpu_custom_call.1} parent=1 // pred_check_branch
      %18 = sbr.rel (0) target = $region17
    $region16: #{tpu_custom_call.1} parent=1 // pred_region
      _
    $region17: #{tpu_custom_call.1} parent=1 // pred_fallthru
      _
    // Predicated region
    $region18: #{tpu_custom_call.1} parent=1 // pred_check
      _
    $region19: #{tpu_custom_call.1} parent=1 // pred_check_branch
      %20 = sbr.rel (0) target = $region21
    $region20: #{tpu_custom_call.1} parent=1 // pred_region
      _
    $region21: #{tpu_custom_call.1} parent=1 // pred_fallthru
      _
    %v21 = vld [vmem:[%s2] sm:$0xff]
    %v22 = vld [vmem:[%s3] sm:$0xff]
    %v23 = vld [vmem:[%s3 + $0x8] sm:$0xff]
    %v24 = vld [vmem:[%s4] sm:$0xff]
    %v25 = vld [vmem:[%s4 + $0x8] sm:$0xff]
    %v26 = vld [vmem:[%s4 + $0x10] sm:$0xff]
    %v27 = vld [vmem:[%s4 + $0x18] sm:$0xff]
    %v28 = vld [vmem:[%s4 + $0x20] sm:$0xff]
    %v29 = vld [vmem:[%s4 + $0x28] sm:$0xff]
    %v30 = vld [vmem:[%s4 + $0x30] sm:$0xff]
    %v31 = vld [vmem:[%s4 + $0x38] sm:$0xff]
    %v32 = vld [vmem:[%s4 + $0x40] sm:$0xff]
    %v33 = vld [vmem:[%s4 + $0x48] sm:$0xff]
    %v34 = vld [vmem:[%s4 + $0x50] sm:$0xff]
    %v35 = vld [vmem:[%s4 + $0x58] sm:$0xff]
    %v36 = vld [vmem:[%s4 + $0x60] sm:$0xff]
    %v37 = vld [vmem:[%s4 + $0x68] sm:$0xff]
    %v38 = vld [vmem:[%s4 + $0x70] sm:$0xff]
    %v39 = vld [vmem:[%s4 + $0x78] sm:$0xff]
    %v40 = vld [vmem:[%s0] sm:$0xff]
    %v41 = vld [vmem:[%s0 + $0x8] sm:$0xff]
    %v42 = vld [vmem:[%s0 + $0x10] sm:$0xff]
    %v43 = vld [vmem:[%s0 + $0x18] sm:$0xff]
    %v44 = vld [vmem:[%s0 + $0x20] sm:$0xff]
    %v45 = vld [vmem:[%s0 + $0x28] sm:$0xff]
    %v46 = vld [vmem:[%s0 + $0x30] sm:$0xff]
    %v47 = vld [vmem:[%s0 + $0x38] sm:$0xff]
    %v48 = vld [vmem:[%s0 + $0x40] sm:$0xff]
    %v49 = vld [vmem:[%s0 + $0x48] sm:$0xff]
    %v50 = vld [vmem:[%s0 + $0x50] sm:$0xff]
    %v51 = vld [vmem:[%s0 + $0x58] sm:$0xff]
    %v52 = vld [vmem:[%s0 + $0x60] sm:$0xff]
    %v53 = vld [vmem:[%s0 + $0x68] sm:$0xff]
    %v54 = vld [vmem:[%s0 + $0x70] sm:$0xff]
    %v55 = vld [vmem:[%s0 + $0x78] sm:$0xff]
    %v56 = vld [vmem:[%s0 + $0x80] sm:$0xff]
    %v57 = vld [vmem:[%s0 + $0x88] sm:$0xff]
    %v58 = vld [vmem:[%s0 + $0x90] sm:$0x1]
    %v59 = vld [vmem:[%s0 + $0x98] sm:$0x1]
    %vm60 = vcmask 596992
    %v62 = vsel %vm60, %v21, 0
    %vm64 = vcmask 1040384
    %v66 = vsel %vm64, %v58, 0
    %v69 = vsel %vm64, %v59, 0
    %71 = vmatprep.subr.mxu0 0.0
    %72 = vmatpush1.msra.mxu0 0.0
    %73 = vmatprep.subr.mxu0 0.0
    %74 = vmatpush1.msra.mxu0 0.0
    %75 = vmatprep.subr.mxu0 0.0
    %76 = vmatpush1.msra.mxu0 0.0
    %77 = vmatprep.subr.mxu0 0.0
    %78 = vmatpush1.msra.mxu0 0.0
    %79 = vmatprep.subr.mxu0 0.0
    %80 = vmatpush1.msra.mxu0 0.0
    %81 = vmatprep.subr.mxu0 0.0
    %82 = vmatpush1.msra.mxu0 0.0
    %83 = vmatprep.subr.mxu0 %v69
    %84 = vmatpush1.msra.mxu0 %v66
    %85 = vmatprep.subr.mxu0 %v57
    %86 = vmatpush1.msra.mxu0 %v56
    %87 = vmatprep.subr.mxu0 %v55
    %88 = vmatpush1.msra.mxu0 %v54
    %89 = vmatprep.subr.mxu0 %v53
    %90 = vmatpush1.msra.mxu0 %v52
    %91 = vmatprep.subr.mxu0 %v51
    %92 = vmatpush1.msra.mxu0 %v50
    %93 = vmatprep.subr.mxu0 %v49
    %94 = vmatpush1.msra.mxu0 %v48
    %95 = vmatprep.subr.mxu0 %v47
    %96 = vmatpush1.msra.mxu0 %v46
    %97 = vmatprep.subr.mxu0 %v45
    %98 = vmatpush1.msra.mxu0 %v44
    %99 = vmatprep.subr.mxu0 %v43
    %100 = vmatpush1.msra.mxu0 %v42
    %101 = vmatprep.subr.mxu0 %v41
    %102 = vmatpush1.msra.mxu0 %v40
    %103 = vmatprep.subr.mxu0 0.0
    %104 = vmatpush2.msra.mxu0 0.0
    %105 = vmatprep.subr.mxu0 0.0
    %106 = vmatpush2.msra.mxu0 0.0
    %107 = vmatprep.subr.mxu0 0.0
    %108 = vmatpush2.msra.mxu0 0.0
    %109 = vmatprep.subr.mxu0 0.0
    %110 = vmatpush2.msra.mxu0 0.0
    %111 = vmatprep.subr.mxu0 0.0
    %112 = vmatpush2.msra.mxu0 0.0
    %113 = vmatprep.subr.mxu0 0.0
    %114 = vmatpush2.msra.mxu0 0.0
    %115 = vmatprep.subr.mxu0 0.0
    %116 = vmatpush2.msra.mxu0 0.0
    %117 = vmatprep.subr.mxu0 0.0
    %118 = vmatpush2.msra.mxu0 0.0
    %119 = vmatprep.subr.mxu0 0.0
    %120 = vmatpush2.msra.mxu0 0.0
    %121 = vmatprep.subr.mxu0 0.0
    %122 = vmatpush2.msra.mxu0 0.0
    %123 = vmatprep.subr.mxu0 0.0
    %124 = vmatpush2.msra.mxu0 0.0
    %125 = vmatprep.subr.mxu0 0.0
    %126 = vmatpush2.msra.mxu0 0.0
    %127 = vmatprep.subr.mxu0 0.0
    %128 = vmatpush2.msra.mxu0 0.0
    %129 = vmatprep.subr.mxu0 0.0
    %130 = vmatpush2.msra.mxu0 0.0
    %131 = vmatprep.subr.mxu0 0.0
    %132 = vmatpush2.msra.mxu0 0.0
    %133 = vmatprep.subr.mxu0 0.0
    %134 = vmatpush2.msra.mxu0 0.0
    %135 = vmatprep.mubr.f32.mxu0 0.0
    %136 = vmatmul.mubr.f32.gmra.mxu0 %v62
    %v137 = vpop.f32.mrf.mxu0
    %v138 = vadd.f32 0.0, %v137
    %v139 = vpop.f32.mrf.mxu0
    %v140 = vadd.f32 0.0, %v139
    %141 = vdwg.mxu0
    %v142 = vmax.f32 %v138, 0.0
    %v143 = vmax.f32 %v140, 0.0
    %v144 = vld [vmem:[%s1] sm:$0xff]
    %v145 = vld [vmem:[%s1 + $0x8] sm:$0xff]
    %v146 = vld [vmem:[%s1 + $0x10] sm:$0xff]
    %v147 = vld [vmem:[%s1 + $0x18] sm:$0xff]
    %v148 = vld [vmem:[%s1 + $0x20] sm:$0xff]
    %v149 = vld [vmem:[%s1 + $0x28] sm:$0xff]
    %v150 = vld [vmem:[%s1 + $0x30] sm:$0xff]
    %v151 = vld [vmem:[%s1 + $0x38] sm:$0xff]
    %v152 = vld [vmem:[%s1 + $0x40] sm:$0xff]
    %v153 = vld [vmem:[%s1 + $0x48] sm:$0xff]
    %v154 = vld [vmem:[%s1 + $0x50] sm:$0xff]
    %v155 = vld [vmem:[%s1 + $0x58] sm:$0xff]
    %v156 = vld [vmem:[%s1 + $0x60] sm:$0xff]
    %v157 = vld [vmem:[%s1 + $0x68] sm:$0xff]
    %v158 = vld [vmem:[%s1 + $0x70] sm:$0xff]
    %v159 = vld [vmem:[%s1 + $0x78] sm:$0xff]
    %v160 = vld [vmem:[%s1 + $0x80] sm:$0xff]
    %v161 = vld [vmem:[%s1 + $0x88] sm:$0xff]
    %v162 = vld [vmem:[%s1 + $0x90] sm:$0x1]
    %vm163 = vcmask 138240
    %v165 = vsel %vm163, %v23, 0
    %v168 = vsel %vm64, %v162, 0
    %170 = vmatprep.subr.mxu0 0.0
    %171 = vmatpush1.msra.mxu0 %v159
    %172 = vmatprep.subr.mxu0 0.0
    %173 = vmatpush1.msra.mxu0 %v158
    %174 = vmatprep.subr.mxu0 0.0
    %175 = vmatpush1.msra.mxu0 %v157
    %176 = vmatprep.subr.mxu0 0.0
    %177 = vmatpush1.msra.mxu0 %v156
    %178 = vmatprep.subr.mxu0 0.0
    %179 = vmatpush1.msra.mxu0 %v155
    %180 = vmatprep.subr.mxu0 0.0
    %181 = vmatpush1.msra.mxu0 %v154
    %182 = vmatprep.subr.mxu0 0.0
    %183 = vmatpush1.msra.mxu0 %v153
    %184 = vmatprep.subr.mxu0 0.0
    %185 = vmatpush1.msra.mxu0 %v152
    %186 = vmatprep.subr.mxu0 0.0
    %187 = vmatpush1.msra.mxu0 %v151
    %188 = vmatprep.subr.mxu0 0.0
    %189 = vmatpush1.msra.mxu0 %v150
    %190 = vmatprep.subr.mxu0 0.0
    %191 = vmatpush1.msra.mxu0 %v149
    %192 = vmatprep.subr.mxu0 0.0
    %193 = vmatpush1.msra.mxu0 %v148
    %194 = vmatprep.subr.mxu0 0.0
    %195 = vmatpush1.msra.mxu0 %v147
    %196 = vmatprep.subr.mxu0 0.0
    %197 = vmatpush1.msra.mxu0 %v146
    %198 = vmatprep.subr.mxu0 0.0
    %199 = vmatpush1.msra.mxu0 %v145
    %200 = vmatprep.subr.mxu0 0.0
    %201 = vmatpush1.msra.mxu0 %v144
    %202 = vmatprep.subr.mxu0 0.0
    %203 = vmatpush2.msra.mxu0 0.0
    %204 = vmatprep.subr.mxu0 0.0
    %205 = vmatpush2.msra.mxu0 0.0
    %206 = vmatprep.subr.mxu0 0.0
    %207 = vmatpush2.msra.mxu0 0.0
    %208 = vmatprep.subr.mxu0 0.0
    %209 = vmatpush2.msra.mxu0 0.0
    %210 = vmatprep.subr.mxu0 0.0
    %211 = vmatpush2.msra.mxu0 0.0
    %212 = vmatprep.subr.mxu0 0.0
    %213 = vmatpush2.msra.mxu0 0.0
    %214 = vmatprep.subr.mxu0 0.0
    %215 = vmatpush2.msra.mxu0 0.0
    %216 = vmatprep.subr.mxu0 0.0
    %217 = vmatpush2.msra.mxu0 0.0
    %218 = vmatprep.subr.mxu0 0.0
    %219 = vmatpush2.msra.mxu0 0.0
    %220 = vmatprep.subr.mxu0 0.0
    %221 = vmatpush2.msra.mxu0 0.0
    %222 = vmatprep.subr.mxu0 0.0
    %223 = vmatpush2.msra.mxu0 0.0
    %224 = vmatprep.subr.mxu0 0.0
    %225 = vmatpush2.msra.mxu0 0.0
    %226 = vmatprep.subr.mxu0 0.0
    %227 = vmatpush2.msra.mxu0 0.0
    %228 = vmatprep.subr.mxu0 0.0
    %229 = vmatpush2.msra.mxu0 %v168
    %230 = vmatprep.subr.mxu0 0.0
    %231 = vmatpush2.msra.mxu0 %v161
    %232 = vmatprep.subr.mxu0 0.0
    %233 = vmatpush2.msra.mxu0 %v160
    %234 = vmatprep.mubr.f32.mxu0 %v165
    %235 = vmatmul.mubr.f32.gmra.mxu0 %v22
    %v236 = vpop.f32.mrf.mxu0
    %v237 = vadd.f32 0.0, %v236
    %v238 = vpop.f32.mrf.mxu0
    %239 = vdwg.mxu0
    %v240 = vmax.f32 %v237, 0.0
    %vm241 = vcmask 523264
    %v243 = vsel %vm241, %v240, 0
    %245 = vmatprep.subr.mxu0 0.0
    %246 = vmatpush1.msra.mxu0 0.0
    %247 = vmatprep.subr.mxu0 0.0
    %248 = vmatpush1.msra.mxu0 0.0
    %249 = vmatprep.subr.mxu0 0.0
    %250 = vmatpush1.msra.mxu0 0.0
    %251 = vmatprep.subr.mxu0 0.0
    %252 = vmatpush1.msra.mxu0 0.0
    %253 = vmatprep.subr.mxu0 0.0
    %254 = vmatpush1.msra.mxu0 0.0
    %255 = vmatprep.subr.mxu0 0.0
    %256 = vmatpush1.msra.mxu0 0.0
    %257 = vmatprep.subr.mxu0 0.0
    %258 = vmatpush1.msra.mxu0 0.0
    %259 = vmatprep.subr.mxu0 0.0
    %260 = vmatpush1.msra.mxu0 0.0
    %261 = vmatprep.subr.mxu0 %v39
    %262 = vmatpush1.msra.mxu0 %v38
    %263 = vmatprep.subr.mxu0 %v37
    %264 = vmatpush1.msra.mxu0 %v36
    %265 = vmatprep.subr.mxu0 %v35
    %266 = vmatpush1.msra.mxu0 %v34
    %267 = vmatprep.subr.mxu0 %v33
    %268 = vmatpush1.msra.mxu0 %v32
    %269 = vmatprep.subr.mxu0 %v31
    %270 = vmatpush1.msra.mxu0 %v30
    %271 = vmatprep.subr.mxu0 %v29
    %272 = vmatpush1.msra.mxu0 %v28
    %273 = vmatprep.subr.mxu0 %v27
    %274 = vmatpush1.msra.mxu0 %v26
    %275 = vmatprep.subr.mxu0 %v25
    %276 = vmatpush1.msra.mxu0 %v24
    %277 = vmatprep.subr.mxu0 0.0
    %278 = vmatpush2.msra.mxu0 0.0
    %279 = vmatprep.subr.mxu0 0.0
    %280 = vmatpush2.msra.mxu0 0.0
    %281 = vmatprep.subr.mxu0 0.0
    %282 = vmatpush2.msra.mxu0 0.0
    %283 = vmatprep.subr.mxu0 0.0
    %284 = vmatpush2.msra.mxu0 0.0
    %285 = vmatprep.subr.mxu0 0.0
    %286 = vmatpush2.msra.mxu0 0.0
    %287 = vmatprep.subr.mxu0 0.0
    %288 = vmatpush2.msra.mxu0 0.0
    %289 = vmatprep.subr.mxu0 0.0
    %290 = vmatpush2.msra.mxu0 0.0
    %291 = vmatprep.subr.mxu0 0.0
    %292 = vmatpush2.msra.mxu0 0.0
    %293 = vmatprep.subr.mxu0 0.0
    %294 = vmatpush2.msra.mxu0 0.0
    %295 = vmatprep.subr.mxu0 0.0
    %296 = vmatpush2.msra.mxu0 0.0
    %297 = vmatprep.subr.mxu0 0.0
    %298 = vmatpush2.msra.mxu0 0.0
    %299 = vmatprep.subr.mxu0 0.0
    %300 = vmatpush2.msra.mxu0 0.0
    %301 = vmatprep.subr.mxu0 0.0
    %302 = vmatpush2.msra.mxu0 0.0
    %303 = vmatprep.subr.mxu0 0.0
    %304 = vmatpush2.msra.mxu0 0.0
    %305 = vmatprep.subr.mxu0 0.0
    %306 = vmatpush2.msra.mxu0 0.0
    %307 = vmatprep.subr.mxu0 0.0
    %308 = vmatpush2.msra.mxu0 0.0
    %309 = vmatprep.mubr.f32.mxu0 0.0
    %310 = vmatmul.mubr.f32.gmra.mxu0 %v243
    %v311 = vpop.f32.mrf.mxu0
    %v312 = vadd.f32 0.0, %v311
    %v313 = vpop.f32.mrf.mxu0
    %v314 = vadd.f32 0.0, %v313
    %315 = vdwg.mxu0
    %v316 = vadd.f32 %v142, %v312
    %v317 = vadd.f32 %v143, %v314
    %318 = vst [vmem:[#allocation2] sm:$0xff] %v316
    %319 = vst [vmem:[#allocation2 + $0x8] sm:$0xff] %v317
    %s320 = scalar_lea.vmem %s0, 160
    %v321 = vld [vmem:[%s320] sm:$0xff]
    %v322 = vld [vmem:[%s320 + $0x8] sm:$0xff]
    %v323 = vld [vmem:[%s320 + $0x10] sm:$0xff]
    %v324 = vld [vmem:[%s320 + $0x18] sm:$0xff]
    %v325 = vld [vmem:[%s320 + $0x20] sm:$0xff]
    %v326 = vld [vmem:[%s320 + $0x28] sm:$0xff]
    %v327 = vld [vmem:[%s320 + $0x30] sm:$0xff]
    %v328 = vld [vmem:[%s320 + $0x38] sm:$0xff]
    %v329 = vld [vmem:[%s320 + $0x40] sm:$0xff]
    %v330 = vld [vmem:[%s320 + $0x48] sm:$0xff]
    %v331 = vld [vmem:[%s320 + $0x50] sm:$0xff]
    %v332 = vld [vmem:[%s320 + $0x58] sm:$0xff]
    %v333 = vld [vmem:[%s320 + $0x60] sm:$0xff]
    %v334 = vld [vmem:[%s320 + $0x68] sm:$0xff]
    %v335 = vld [vmem:[%s320 + $0x70] sm:$0xff]
    %v336 = vld [vmem:[%s320 + $0x78] sm:$0xff]
    %v337 = vld [vmem:[%s320 + $0x80] sm:$0xff]
    %v338 = vld [vmem:[%s320 + $0x88] sm:$0xff]
    %v339 = vld [vmem:[%s320 + $0x90] sm:$0x1]
    %v340 = vld [vmem:[%s320 + $0x98] sm:$0x1]
    %v342 = vsel %vm64, %v339, 0
    %v345 = vsel %vm64, %v340, 0
    %347 = vmatprep.subr.mxu0 0.0
    %348 = vmatpush1.msra.mxu0 0.0
    %349 = vmatprep.subr.mxu0 0.0
    %350 = vmatpush1.msra.mxu0 0.0
    %351 = vmatprep.subr.mxu0 0.0
    %352 = vmatpush1.msra.mxu0 0.0
    %353 = vmatprep.subr.mxu0 0.0
    %354 = vmatpush1.msra.mxu0 0.0
    %355 = vmatprep.subr.mxu0 0.0
    %356 = vmatpush1.msra.mxu0 0.0
    %357 = vmatprep.subr.mxu0 0.0
    %358 = vmatpush1.msra.mxu0 0.0
    %359 = vmatprep.subr.mxu0 %v345
    %360 = vmatpush1.msra.mxu0 %v342
    %361 = vmatprep.subr.mxu0 %v338
    %362 = vmatpush1.msra.mxu0 %v337
    %363 = vmatprep.subr.mxu0 %v336
    %364 = vmatpush1.msra.mxu0 %v335
    %365 = vmatprep.subr.mxu0 %v334
    %366 = vmatpush1.msra.mxu0 %v333
    %367 = vmatprep.subr.mxu0 %v332
    %368 = vmatpush1.msra.mxu0 %v331
    %369 = vmatprep.subr.mxu0 %v330
    %370 = vmatpush1.msra.mxu0 %v329
    %371 = vmatprep.subr.mxu0 %v328
    %372 = vmatpush1.msra.mxu0 %v327
    %373 = vmatprep.subr.mxu0 %v326
    %374 = vmatpush1.msra.mxu0 %v325
    %375 = vmatprep.subr.mxu0 %v324
    %376 = vmatpush1.msra.mxu0 %v323
    %377 = vmatprep.subr.mxu0 %v322
    %378 = vmatpush1.msra.mxu0 %v321
    %379 = vmatprep.subr.mxu0 0.0
    %380 = vmatpush2.msra.mxu0 0.0
    %381 = vmatprep.subr.mxu0 0.0
    %382 = vmatpush2.msra.mxu0 0.0
    %383 = vmatprep.subr.mxu0 0.0
    %384 = vmatpush2.msra.mxu0 0.0
    %385 = vmatprep.subr.mxu0 0.0
    %386 = vmatpush2.msra.mxu0 0.0
    %387 = vmatprep.subr.mxu0 0.0
    %388 = vmatpush2.msra.mxu0 0.0
    %389 = vmatprep.subr.mxu0 0.0
    %390 = vmatpush2.msra.mxu0 0.0
    %391 = vmatprep.subr.mxu0 0.0
    %392 = vmatpush2.msra.mxu0 0.0
    %393 = vmatprep.subr.mxu0 0.0
    %394 = vmatpush2.msra.mxu0 0.0
    %395 = vmatprep.subr.mxu0 0.0
    %396 = vmatpush2.msra.mxu0 0.0
    %397 = vmatprep.subr.mxu0 0.0
    %398 = vmatpush2.msra.mxu0 0.0
    %399 = vmatprep.subr.mxu0 0.0
    %400 = vmatpush2.msra.mxu0 0.0
    %401 = vmatprep.subr.mxu0 0.0
    %402 = vmatpush2.msra.mxu0 0.0
    %403 = vmatprep.subr.mxu0 0.0
    %404 = vmatpush2.msra.mxu0 0.0
    %405 = vmatprep.subr.mxu0 0.0
    %406 = vmatpush2.msra.mxu0 0.0
    %407 = vmatprep.subr.mxu0 0.0
    %408 = vmatpush2.msra.mxu0 0.0
    %409 = vmatprep.subr.mxu0 0.0
    %410 = vmatpush2.msra.mxu0 0.0
    %411 = vmatprep.mubr.f32.mxu0 0.0
    %412 = vmatmul.mubr.f32.gmra.mxu0 %v62
    %v413 = vpop.f32.mrf.mxu0
    %v414 = vadd.f32 0.0, %v413
    %v415 = vpop.f32.mrf.mxu0
    %v416 = vadd.f32 0.0, %v415
    %417 = vdwg.mxu0
    %v418 = vmax.f32 %v414, 0.0
    %v419 = vmax.f32 %v416, 0.0
    %s420 = scalar_lea.vmem %s1, 152
    %v421 = vld [vmem:[%s420] sm:$0xff]
    %v422 = vld [vmem:[%s420 + $0x8] sm:$0xff]
    %v423 = vld [vmem:[%s420 + $0x10] sm:$0xff]
    %v424 = vld [vmem:[%s420 + $0x18] sm:$0xff]
    %v425 = vld [vmem:[%s420 + $0x20] sm:$0xff]
    %v426 = vld [vmem:[%s420 + $0x28] sm:$0xff]
    %v427 = vld [vmem:[%s420 + $0x30] sm:$0xff]
    %v428 = vld [vmem:[%s420 + $0x38] sm:$0xff]
    %v429 = vld [vmem:[%s420 + $0x40] sm:$0xff]
    %v430 = vld [vmem:[%s420 + $0x48] sm:$0xff]
    %v431 = vld [vmem:[%s420 + $0x50] sm:$0xff]
    %v432 = vld [vmem:[%s420 + $0x58] sm:$0xff]
    %v433 = vld [vmem:[%s420 + $0x60] sm:$0xff]
    %v434 = vld [vmem:[%s420 + $0x68] sm:$0xff]
    %v435 = vld [vmem:[%s420 + $0x70] sm:$0xff]
    %v436 = vld [vmem:[%s420 + $0x78] sm:$0xff]
    %v437 = vld [vmem:[%s420 + $0x80] sm:$0xff]
    %v438 = vld [vmem:[%s420 + $0x88] sm:$0xff]
    %v439 = vld [vmem:[%s420 + $0x90] sm:$0x1]
    %v441 = vsel %vm64, %v439, 0
    %443 = vmatprep.subr.mxu0 0.0
    %444 = vmatpush1.msra.mxu0 %v436
    %445 = vmatprep.subr.mxu0 0.0
    %446 = vmatpush1.msra.mxu0 %v435
    %447 = vmatprep.subr.mxu0 0.0
    %448 = vmatpush1.msra.mxu0 %v434
    %449 = vmatprep.subr.mxu0 0.0
    %450 = vmatpush1.msra.mxu0 %v433
    %451 = vmatprep.subr.mxu0 0.0
    %452 = vmatpush1.msra.mxu0 %v432
    %453 = vmatprep.subr.mxu0 0.0
    %454 = vmatpush1.msra.mxu0 %v431
    %455 = vmatprep.subr.mxu0 0.0
    %456 = vmatpush1.msra.mxu0 %v430
    %457 = vmatprep.subr.mxu0 0.0
    %458 = vmatpush1.msra.mxu0 %v429
    %459 = vmatprep.subr.mxu0 0.0
    %460 = vmatpush1.msra.mxu0 %v428
    %461 = vmatprep.subr.mxu0 0.0
    %462 = vmatpush1.msra.mxu0 %v427
    %463 = vmatprep.subr.mxu0 0.0
    %464 = vmatpush1.msra.mxu0 %v426
    %465 = vmatprep.subr.mxu0 0.0
    %466 = vmatpush1.msra.mxu0 %v425
    %467 = vmatprep.subr.mxu0 0.0
    %468 = vmatpush1.msra.mxu0 %v424
    %469 = vmatprep.subr.mxu0 0.0
    %470 = vmatpush1.msra.mxu0 %v423
    %471 = vmatprep.subr.mxu0 0.0
    %472 = vmatpush1.msra.mxu0 %v422
    %473 = vmatprep.subr.mxu0 0.0
    %474 = vmatpush1.msra.mxu0 %v421
    %475 = vmatprep.subr.mxu0 0.0
    %476 = vmatpush2.msra.mxu0 0.0
    %477 = vmatprep.subr.mxu0 0.0
    %478 = vmatpush2.msra.mxu0 0.0
    %479 = vmatprep.subr.mxu0 0.0
    %480 = vmatpush2.msra.mxu0 0.0
    %481 = vmatprep.subr.mxu0 0.0
    %482 = vmatpush2.msra.mxu0 0.0
    %483 = vmatprep.subr.mxu0 0.0
    %484 = vmatpush2.msra.mxu0 0.0
    %485 = vmatprep.subr.mxu0 0.0
    %486 = vmatpush2.msra.mxu0 0.0
    %487 = vmatprep.subr.mxu0 0.0
    %488 = vmatpush2.msra.mxu0 0.0
    %489 = vmatprep.subr.mxu0 0.0
    %490 = vmatpush2.msra.mxu0 0.0
    %491 = vmatprep.subr.mxu0 0.0
    %492 = vmatpush2.msra.mxu0 0.0
    %493 = vmatprep.subr.mxu0 0.0
    %494 = vmatpush2.msra.mxu0 0.0
    %495 = vmatprep.subr.mxu0 0.0
    %496 = vmatpush2.msra.mxu0 0.0
    %497 = vmatprep.subr.mxu0 0.0
    %498 = vmatpush2.msra.mxu0 0.0
    %499 = vmatprep.subr.mxu0 0.0
    %500 = vmatpush2.msra.mxu0 0.0
    %501 = vmatprep.subr.mxu0 0.0
    %502 = vmatpush2.msra.mxu0 %v441
    %503 = vmatprep.subr.mxu0 0.0
    %504 = vmatpush2.msra.mxu0 %v438
    %505 = vmatprep.subr.mxu0 0.0
    %506 = vmatpush2.msra.mxu0 %v437
    %507 = vmatprep.mubr.f32.mxu0 %v165
    %508 = vmatmul.mubr.f32.gmra.mxu0 %v22
    %v509 = vpop.f32.mrf.mxu0
    %v510 = vadd.f32 0.0, %v509
    %v511 = vpop.f32.mrf.mxu0
    %512 = vdwg.mxu0
    %v513 = vmax.f32 %v510, 0.0
    %v515 = vsel %vm241, %v513, 0
    %517 = vmatprep.subr.mxu0 0.0
    %518 = vmatpush1.msra.mxu0 0.0
    %519 = vmatprep.subr.mxu0 0.0
    %520 = vmatpush1.msra.mxu0 0.0
    %521 = vmatprep.subr.mxu0 0.0
    %522 = vmatpush1.msra.mxu0 0.0
    %523 = vmatprep.subr.mxu0 0.0
    %524 = vmatpush1.msra.mxu0 0.0
    %525 = vmatprep.subr.mxu0 0.0
    %526 = vmatpush1.msra.mxu0 0.0
    %527 = vmatprep.subr.mxu0 0.0
    %528 = vmatpush1.msra.mxu0 0.0
    %529 = vmatprep.subr.mxu0 0.0
    %530 = vmatpush1.msra.mxu0 0.0
    %531 = vmatprep.subr.mxu0 0.0
    %532 = vmatpush1.msra.mxu0 0.0
    %533 = vmatprep.subr.mxu0 %v39
    %534 = vmatpush1.msra.mxu0 %v38
    %535 = vmatprep.subr.mxu0 %v37
    %536 = vmatpush1.msra.mxu0 %v36
    %537 = vmatprep.subr.mxu0 %v35
    %538 = vmatpush1.msra.mxu0 %v34
    %539 = vmatprep.subr.mxu0 %v33
    %540 = vmatpush1.msra.mxu0 %v32
    %541 = vmatprep.subr.mxu0 %v31
    %542 = vmatpush1.msra.mxu0 %v30
    %543 = vmatprep.subr.mxu0 %v29
    %544 = vmatpush1.msra.mxu0 %v28
    %545 = vmatprep.subr.mxu0 %v27
    %546 = vmatpush1.msra.mxu0 %v26
    %547 = vmatprep.subr.mxu0 %v25
    %548 = vmatpush1.msra.mxu0 %v24
    %549 = vmatprep.subr.mxu0 0.0
    %550 = vmatpush2.msra.mxu0 0.0
    %551 = vmatprep.subr.mxu0 0.0
    %552 = vmatpush2.msra.mxu0 0.0
    %553 = vmatprep.subr.mxu0 0.0
    %554 = vmatpush2.msra.mxu0 0.0
    %555 = vmatprep.subr.mxu0 0.0
    %556 = vmatpush2.msra.mxu0 0.0
    %557 = vmatprep.subr.mxu0 0.0
    %558 = vmatpush2.msra.mxu0 0.0
    %559 = vmatprep.subr.mxu0 0.0
    %560 = vmatpush2.msra.mxu0 0.0
    %561 = vmatprep.subr.mxu0 0.0
    %562 = vmatpush2.msra.mxu0 0.0
    %563 = vmatprep.subr.mxu0 0.0
    %564 = vmatpush2.msra.mxu0 0.0
    %565 = vmatprep.subr.mxu0 0.0
    %566 = vmatpush2.msra.mxu0 0.0
    %567 = vmatprep.subr.mxu0 0.0
    %568 = vmatpush2.msra.mxu0 0.0
    %569 = vmatprep.subr.mxu0 0.0
    %570 = vmatpush2.msra.mxu0 0.0
    %571 = vmatprep.subr.mxu0 0.0
    %572 = vmatpush2.msra.mxu0 0.0
    %573 = vmatprep.subr.mxu0 0.0
    %574 = vmatpush2.msra.mxu0 0.0
    %575 = vmatprep.subr.mxu0 0.0
    %576 = vmatpush2.msra.mxu0 0.0
    %577 = vmatprep.subr.mxu0 0.0
    %578 = vmatpush2.msra.mxu0 0.0
    %579 = vmatprep.subr.mxu0 0.0
    %580 = vmatpush2.msra.mxu0 0.0
    %581 = vmatprep.mubr.f32.mxu0 0.0
    %582 = vmatmul.mubr.f32.gmra.mxu0 %v515
    %v583 = vpop.f32.mrf.mxu0
    %v584 = vadd.f32 0.0, %v583
    %v585 = vpop.f32.mrf.mxu0
    %v586 = vadd.f32 0.0, %v585
    %587 = vdwg.mxu0
    %v588 = vadd.f32 %v418, %v584
    %v589 = vadd.f32 %v419, %v586
    %s590 = scalar_lea.vmem [#allocation2], 16
    %591 = vst [vmem:[%s590] sm:$0xff] %v588
    %592 = vst [vmem:[%s590 + $0x8] sm:$0xff] %v589
    // Predicated region
    $region22: #{tpu_custom_call.1} parent=1 // pred_check
      _
    $region23: #{tpu_custom_call.1} parent=1 // pred_check_branch
      %594 = sbr.rel (0) target = $region25
    $region24: #{tpu_custom_call.1} parent=1 // pred_region
      %s596 = ssub.s32 512, 512
      %597 = vsyncadd [#allocation3], %s596
      %s598 = sshll.u32 [#allocation2], 4
      %s599 = int_to_ptr.vmem [resolvable:$true] %s598
      %604 = dma.vmem_to_hbm [thread:$0]  %s599, 512, %s5, [#allocation3], 256, 256, 16
    $region25: #{tpu_custom_call.1} parent=1 // pred_fallthru
      _
    // Predicated region
    $region26: #{tpu_custom_call.1} parent=1 // pred_check
      _
    $region27: #{tpu_custom_call.1} parent=1 // pred_check_branch
      %606 = sbr.rel (0) target = $region29
    $region28: #{tpu_custom_call.1} parent=1 // pred_region
      %607 = dma.done [#allocation3], 512
    $region29: #{tpu_custom_call.1} parent=1 // pred_fallthru
      _
    %608 = vsyncpa [#allocation3], 1

</llo_original>
